<compile_context>
chip_gen: v7x
topology: tpu7x:2x2x1
jax: 0.10.0
libtpu: 0.0.40
codegen_flags: <defaults>
</compile_context>

<pallas_src>
import jax
import jax.numpy as jnp
import numpy as np
from jax.experimental import pallas as pl
from jax.experimental.pallas import tpu as pltpu


def _round_up(a, b):
    return -(-a // b) * b


# ----------------------------------------------------------------------------
# Kernel 1: stem conv (im2col matmul, BN folded into weights) + SiLU
# ----------------------------------------------------------------------------
def _stem_kernel(p_ref, w_ref, b_ref, o_ref):
    # p_ref: (TM, pack*K)        bf16 packed im2col patches
    # w_ref: (pack*K, pack*Cout) bf16 block-diagonal weight (BN scale folded in)
    # b_ref: (1, pack*Cout)      f32 folded BN bias (tiled `pack` times)
    # o_ref: (TM, pack*Cout)     bf16  (cast on store only; math stays f32)
    y = jnp.dot(p_ref[...], w_ref[...], preferred_element_type=jnp.float32)
    y = y + b_ref[...]                              # f32 epilogue (v5e-safe)
    o_ref[...] = (y * jax.nn.sigmoid(y)).astype(o_ref.dtype)   # SiLU, bf16 store


def stem_conv_bn_silu(x_nchw, conv_w, bn_scale, bn_bias, *, tm=2048):
    """Conv2d(3,64,3,stride=2,pad=1,bias=False) + BN(eval) + SiLU.

    x_nchw: (N, Cin, H, W) f32 (PyTorch layout).
    Returns channels-last (N, Ho, Wo, 64) bf16 so the channel axis stays on the
    TPU lane axis for downstream stages.  `tm` = packed rows (4 spatial
    positions each) per grid step.
    """
    n, cin, h, w = x_nchw.shape
    cout = conv_w.shape[0]
    ho = (h + 2 - 3) // 2 + 1
    wo = (w + 2 - 3) // 2 + 1
    kdim = 9 * cin
    pack = 4                                  # spatial positions packed per row

    # --- im2col in XLA on the (tiny, 3-channel) input; bf16 halves its traffic.
    x = jnp.transpose(x_nchw, (0, 2, 3, 1)).astype(jnp.bfloat16)   # NHWC
    xp = jnp.pad(x, ((0, 0), (1, 1), (1, 1), (0, 0)))
    cols = [xp[:, kh:kh + 2 * (ho - 1) + 1:2, kw:kw + 2 * (wo - 1) + 1:2, :]
            for kh in range(3) for kw in range(3)]
    patches = jnp.concatenate(cols, axis=-1).reshape(n * ho * wo, kdim)

    # --- fold BN scale into the weights; build the pack-block-diagonal weight.
    w2 = jnp.transpose(conv_w, (2, 3, 1, 0)).reshape(kdim, cout)   # (kh,kw,ci)->co
    w2 = w2 * bn_scale[None, :]
    wblk = jnp.kron(jnp.eye(pack, dtype=jnp.float32), w2).astype(jnp.bfloat16)
    bblk = jnp.tile(bn_bias.astype(jnp.float32).reshape(1, cout), (1, pack))

    # --- pack 4 positions per row; pad rows to a multiple of the M tile.
    m = n * ho * wo
    m4 = -(-m // pack)
    tm = max(16, (min(tm, _round_up(m4, 16)) // 16) * 16)   # multiple of 16
    mp4 = _round_up(m4, tm)
    mp = mp4 * pack
    if mp != m:
        patches = jnp.pad(patches, ((0, mp - m), (0, 0)))
    p4 = patches.reshape(mp4, pack * kdim)          # free contiguous reshape
    co_p = pack * cout

    out = pl.pallas_call(
        _stem_kernel,
        out_shape=jax.ShapeDtypeStruct((mp4, co_p), jnp.bfloat16),
        grid=(mp4 // tm,),
        in_specs=[
            pl.BlockSpec((tm, pack * kdim), lambda i: (i, 0)),
            pl.BlockSpec((pack * kdim, co_p), lambda i: (0, 0)),
            pl.BlockSpec((1, co_p), lambda i: (0, 0)),
        ],
        out_specs=pl.BlockSpec((tm, co_p), lambda i: (i, 0)),
        compiler_params=pltpu.CompilerParams(
            dimension_semantics=("parallel",)),
    )(p4, wblk, bblk)

    # (mp4, pack*cout) -> (mp, cout) is a free contiguous reshape (unpack rows);
    # only slice when row padding actually exists (avoids a second full pass).
    out2 = out.reshape(mp, cout)
    if mp != m:
        out2 = out2[:m]
    return out2.reshape(n, ho, wo, cout)


# ----------------------------------------------------------------------------
# Kernel 2: fused global-avg-pool + Linear(2560, num_classes) classifier head
# (Dropout is an identity in eval mode.)
# ----------------------------------------------------------------------------
def _make_head_kernel(inv_hw, tb):
    def head_kernel(x_ref, w_ref, b_ref, o_ref, acc_ref):
        # x_ref: (TB, THW, C) bf16 feature chunk (channels on the lane axis)
        # w_ref: (C, Kp)      bf16 classifier weight (classes padded to 128)
        # b_ref: (1, Kp)      f32 bias
        # o_ref: (TB, Kp)     f32 logits for this batch tile
        # acc_ref: (TB, C)    f32 running sum over the HW reduction axis
        j = pl.program_id(1)

        @pl.when(j == 0)
        def _():
            acc_ref[...] = jnp.zeros_like(acc_ref)

        # Per-image sublane reduction over the HW chunk, accumulated in f32.
        # Static unrolled loop keeps the f32 intermediate at (THW, C) per step.
        for b in range(tb):
            acc_ref[b:b + 1, :] += jnp.sum(
                x_ref[b].astype(jnp.float32), axis=0, keepdims=True)

        @pl.when(j == pl.num_programs(1) - 1)
        def _():
            # Deliberate bf16 quantization of the pooled vector so the
            # classifier matmul stays on the bf16 MXU path (f32 accumulation).
            pooled = (acc_ref[...] * inv_hw).astype(jnp.bfloat16)   # (TB, C)
            logits = jnp.dot(pooled, w_ref[...],
                             preferred_element_type=jnp.float32) + b_ref[...]
            o_ref[...] = logits

    return head_kernel


def avgpool_linear_head(feats_nhwc, lin_w, lin_b, *, thw=128, tb=8):
    """AdaptiveAvgPool2d(1) + flatten + Dropout(eval=id) + Linear(2560, K).

    feats_nhwc: (N, H, W, 2560) channels-last features (C on the lane axis, so
    no XLA transpose is needed).  lin_w: (K, 2560), lin_b: (K,) in PyTorch
    layout.  Returns (N, K) f32 logits.  Batch is tiled 8 per step (full-vreg
    output stores); HW is the last ("arbitrary") reduction grid axis.
    """
    n, h, w, c = feats_nhwc.shape
    k = lin_w.shape[0]
    hw = h * w
    kp = _round_up(k, 128)                        # pad classes to a lane multiple

    thw = max(8, (min(thw, _round_up(hw, 8)) // 8) * 8)   # multiple of 8
    hwp = _round_up(hw, thw)
    nb = _round_up(n, tb) // tb
    n_pad = nb * tb

    x = feats_nhwc.reshape(n, hw, c)              # free reshape (C already last)
    x = jnp.pad(x, ((0, n_pad - n), (0, hwp - hw), (0, 0))).astype(jnp.bfloat16)

    wp = jnp.zeros((c, kp), jnp.float32).at[:, :k].set(lin_w.T).astype(jnp.bfloat16)
    bp = jnp.zeros((1, kp), jnp.float32).at[:, :k].set(lin_b.reshape(1, k))

    out = pl.pallas_call(
        _make_head_kernel(1.0 / float(hw), tb),
        out_shape=jax.ShapeDtypeStruct((n_pad, kp), jnp.float32),
        grid_spec=pltpu.PrefetchScalarGridSpec(
            num_scalar_prefetch=0,
            grid=(nb, hwp // thw),                # reduction (HW) axis last
            in_specs=[
                pl.BlockSpec((tb, thw, c), lambda i, j: (i, j, 0)),
                pl.BlockSpec((c, kp), lambda i, j: (0, 0)),
                pl.BlockSpec((1, kp), lambda i, j: (0, 0)),
            ],
            out_specs=pl.BlockSpec((tb, kp), lambda i, j: (i, 0)),
            scratch_shapes=[pltpu.VMEM((tb, c), jnp.float32)],
        ),
        compiler_params=pltpu.CompilerParams(
            dimension_semantics=("parallel", "arbitrary")),
    )(x, wp, bp)

    return out[:n, :k]


# ----------------------------------------------------------------------------
# Pure-JAX references (module semantics, f32) — for correctness checking only
# ----------------------------------------------------------------------------
def stem_ref(x_nchw, conv_w_folded, bias):
    """Conv(s=2, p=1) with BN scale pre-folded into conv_w_folded, + bias + SiLU."""
    y = jax.lax.conv_general_dilated(
        x_nchw, conv_w_folded, window_strides=(2, 2), padding=((1, 1), (1, 1)),
        dimension_numbers=("NCHW", "OIHW", "NCHW"))
    y = y + bias[None, :, None, None]
    return y * jax.nn.sigmoid(y)


def head_ref(feats_nhwc, lin_w, lin_b):
    pooled = feats_nhwc.mean(axis=(1, 2))
    return pooled @ lin_w.T + lin_b


if __name__ == "__main__":
    key = jax.random.PRNGKey(0)
    k_img, k_cw, k_g, k_b, k_m, k_v, k_feat, k_lw, k_lb = jax.random.split(key, 9)

    # --- small shapes consistent with the module (CIFAR-100 input, B7 widths) ---
    N, CIN, H, W = 2, 3, 32, 32
    C_STEM = 64                  # B7 stem width
    C_FEAT = 2560                # B7 final feature width (classifier in_features)
    NUM_CLASSES = 100            # CIFAR-100
    FH = FW = 4                  # small trunk-output spatial size

    # --- deterministic parameter init ---
    x = jax.random.normal(k_img, (N, CIN, H, W), jnp.float32)
    conv_w = jax.random.normal(k_cw, (C_STEM, CIN, 3, 3), jnp.float32) * 0.1
    gamma = 1.0 + 0.1 * jax.random.normal(k_g, (C_STEM,), jnp.float32)
    beta = 0.1 * jax.random.normal(k_b, (C_STEM,), jnp.float32)
    run_mean = 0.1 * jax.random.normal(k_m, (C_STEM,), jnp.float32)
    run_var = jnp.abs(1.0 + 0.1 * jax.random.normal(k_v, (C_STEM,), jnp.float32))
    eps = 1e-3                   # torchvision EfficientNet BN eps
    bn_scale = gamma / jnp.sqrt(run_var + eps)
    bn_bias = beta - run_mean * bn_scale

    feats = jax.random.normal(k_feat, (N, FH, FW, C_FEAT), jnp.float32)  # NHWC
    lin_w = jax.random.normal(k_lw, (NUM_CLASSES, C_FEAT), jnp.float32) * 0.02
    lin_b = jax.random.normal(k_lb, (NUM_CLASSES,), jnp.float32) * 0.02

    # --- run Pallas kernels (small tiles so toy shapes exercise >1 grid step) ---
    stem_out = jax.block_until_ready(
        stem_conv_bn_silu(x, conv_w, bn_scale, bn_bias, tm=64))
    logits = jax.block_until_ready(
        avgpool_linear_head(feats, lin_w, lin_b, thw=8))

    assert stem_out.shape == (N, H // 2, W // 2, C_STEM)
    assert stem_out.dtype == jnp.bfloat16
    assert logits.shape == (N, NUM_CLASSES)

    # --- verify: module math in f32, fed the same bf16-quantized operands the
    # kernels consume (isolates kernel correctness from the deliberate bf16
    # traffic optimizations).  Stem tolerance accounts for the bf16 store.
    def q(a):
        return a.astype(jnp.bfloat16).astype(jnp.float32)

    w_folded_q = q(conv_w * bn_scale[:, None, None, None])
    stem_gold = stem_ref(q(x), w_folded_q, bn_bias)               # NCHW, f32
    head_gold = head_ref(q(feats), q(lin_w), lin_b)

    stem_k = np.asarray(
        jnp.transpose(stem_out.astype(jnp.float32), (0, 3, 1, 2)))
    np.testing.assert_allclose(stem_k, np.asarray(stem_gold),
                               rtol=1e-2, atol=1e-2)
    np.testing.assert_allclose(np.asarray(logits), np.asarray(head_gold),
                               rtol=2e-3, atol=2e-3)

    print("KERNEL_OK")
</pallas_src>

<mosaic_0001>
module attributes {stable_mosaic.version = 11 : i64} {
  func.func @_stem_kernel(%arg0: i32, %arg1: memref<64x108xbf16, #tpu.memory_space<vmem>>, %arg2: memref<108x256xbf16, #tpu.memory_space<vmem>>, %arg3: memref<1x256xf32, #tpu.memory_space<vmem>>, %arg4: memref<64x256xbf16, #tpu.memory_space<vmem>>) attributes {dimension_semantics = [#tpu.dimension_semantics<parallel>], iteration_bounds = array<i64: 2>, scalar_prefetch = 0 : i64, scratch_operands = 0 : i64, tpu.core_type = #tpu.core_type<tc>, window_params = [{transform_indices = @transform_0, window_bounds = array<i64: 64, 108>}, {pipeline_mode = #tpu.pipeline_mode<synchronous>, transform_indices = @transform_1, window_bounds = array<i64: 108, 256>}, {pipeline_mode = #tpu.pipeline_mode<synchronous>, transform_indices = @transform_2, window_bounds = array<i64: 1, 256>}, {transform_indices = @transform_3, window_bounds = array<i64: 64, 256>}]} {
    %c0 = arith.constant 0 : index
    %c0_0 = arith.constant 0 : index
    %0 = vector.load %arg1[%c0, %c0_0] : memref<64x108xbf16, #tpu.memory_space<vmem>>, vector<64x108xbf16>
    %c0_1 = arith.constant 0 : index
    %c0_2 = arith.constant 0 : index
    %1 = vector.load %arg2[%c0_1, %c0_2] : memref<108x256xbf16, #tpu.memory_space<vmem>>, vector<108x256xbf16>
    %cst = arith.constant dense<0.000000e+00> : vector<64x256xf32>
    %2 = tpu.matmul %0, %1, %cst {dimension_numbers = #tpu.dot_dimension_numbers<[1], [0], [0], [1], [0, 0, 1, 1], [], []>} : vector<64x108xbf16>, vector<108x256xbf16>, vector<64x256xf32> -> vector<64x256xf32>
    %c0_3 = arith.constant 0 : index
    %c0_4 = arith.constant 0 : index
    %3 = vector.load %arg3[%c0_3, %c0_4] : memref<1x256xf32, #tpu.memory_space<vmem>>, vector<1x256xf32>
    %4 = vector.broadcast %3 : vector<1x256xf32> to vector<64x256xf32>
    %5 = arith.addf %2, %4 : vector<64x256xf32>
    %6 = arith.negf %5 : vector<64x256xf32>
    %7 = math.exp %6 : vector<64x256xf32>
    %cst_5 = arith.constant 1.000000e+00 : f32
    %8 = vector.broadcast %cst_5 : f32 to vector<64x256xf32>
    %9 = arith.addf %8, %7 : vector<64x256xf32>
    %10 = arith.divf %8, %9 : vector<64x256xf32>
    %11 = arith.mulf %5, %10 : vector<64x256xf32>
    %12 = arith.truncf %11 : vector<64x256xf32> to vector<64x256xbf16>
    %c0_6 = arith.constant 0 : index
    %c0_7 = arith.constant 0 : index
    %13 = vector.load %arg4[%c0_6, %c0_7] : memref<64x256xbf16, #tpu.memory_space<vmem>>, vector<64x256xbf16>
    tpu.vector_store %arg4[%c0_6, %c0_7], %12 {strides = array<i32>} : memref<64x256xbf16, #tpu.memory_space<vmem>>, vector<64x256xbf16>,
    return
  }
  func.func @transform_0(%arg0: i32) -> (i32, i32) {
    %c0_i32 = arith.constant 0 : i32
    %c0_i32_0 = arith.constant 0 : i32
    return %arg0, %c0_i32 : i32, i32
  }
  func.func @transform_1(%arg0: i32) -> (i32, i32) {
    %c0_i32 = arith.constant 0 : i32
    %c0_i32_0 = arith.constant 0 : i32
    %c0_i32_1 = arith.constant 0 : i32
    return %c0_i32, %c0_i32_0 : i32, i32
  }
  func.func @transform_2(%arg0: i32) -> (i32, i32) {
    %c0_i32 = arith.constant 0 : i32
    %c0_i32_0 = arith.constant 0 : i32
    %c0_i32_1 = arith.constant 0 : i32
    return %c0_i32, %c0_i32_0 : i32, i32
  }
  func.func @transform_3(%arg0: i32) -> (i32, i32) {
    %c0_i32 = arith.constant 0 : i32
    %c0_i32_0 = arith.constant 0 : i32
    return %arg0, %c0_i32 : i32, i32
  }
}

</mosaic_0001>

<llo_original>
// kernel: tpu_custom_call.1
$region0: #{tpu_custom_call.1}
  #allocation0 [shape = 'u32[]', space=smem, size = 0x4, offset = 0x4, fixed_abs, tag = 'smem constant byte address 0x4 - core index']
  #allocation1 [shape = 'u32[144,128]{1,0:T(1,128)}', space=vmem, size = 0x12000, scoped, tag = 'internal scratch']
  %s0 = inlined_call_operand.vmem [shape: bf16[128,108], index: 0, kind: input, shape index: {}]
  %s1 = inlined_call_operand.vmem [shape: bf16[108,256], index: 1, kind: input, shape index: {}]
  %s2 = inlined_call_operand.vmem [shape: f32[1,256], index: 2, kind: input, shape index: {}]
  %s3 = inlined_call_operand.hbm [shape: bf16[128,256], index: 3, kind: output, shape index: {}]
  %s4 = sld [smem:[#allocation0]]
  $region45: #{tpu_custom_call.1} parent=0
    _
  %s6 = ssub.s32 1, %s4
  %s7 = scalar_select 0, %s6, %s4
  $region1: #{tpu_custom_call.1} parent=0
    #allocation2 [shape = 'u8[65536]{0}', space=vmem, size = 0x10000, scoped, tag = 'output window, operand 0']
    #allocation3 [shape = 's32[2]{0}', space=sflag, size = 0x8, scoped, tag = 'scoped memory for tpu_custom_call.1']
    %8 = vsyncpa [#allocation3], 0
    %s9 = scalar_lea.sflag [#allocation3], 1
    %10 = vsyncpa %s9, 0
    loop: start=0, step=1, limit=4
    $region2: #{tpu_custom_call.1} parent=1 // loop_pre_header
      _
    $region3: #{tpu_custom_call.1} parent=1 // loop_header
      %s12 = sphi 0, %s16
      %p13 = scmp.ge.s32.totalorder %s12, 4
      %s22 = sphi 0, %s24
      %s25 = sphi 0, %s22
      %s26 = sphi 0, %s25
      %s42 = sphi 0, %s26
      %s46 = sphi 0, %s46
      %s48 = sphi 0, %s46
      %s49 = sphi 0, %s48
      %s63 = sphi 0, %s49
      %s67 = sphi 0, %s67
      %s69 = sphi 0, %s67
      %s70 = sphi 0, %s69
      %s84 = sphi 0, %s70
      %s90 = sphi 0, %s92
      %s93 = sphi 0, %s90
      %s94 = sphi 0, %s93
      %s110 = sphi 0, %s94
    $region4: #{tpu_custom_call.1} parent=1 // loop_header_branch
      %15 = sbr.rel (%p13) target = $region8
    $region5: #{tpu_custom_call.1} parent=1 // loop_body
      %s17 = ssub.s32 %s12, 1
      %s18 = ssub.s32 %s12, 2
      %s19 = sadd.s32 %s12, 1
      %s20 = ssub.s32 %s12, %s19
      %p21 = scmp.eq.s32.totalorder %s20, 0
      %s23 = sadd.s32 %s22, 1
      %s24 = scalar_select %p21, %s22, %s23
      %p27 = pneg %p21
      %p28 = scmp.eq.s32.totalorder %s12, 1
      %p29 = por %p27, %p28
      %p30 = scmp.ne.s32.totalorder %s22, %s25
      %p31 = scmp.eq.s32.totalorder %s12, 0
      %p32 = por %p30, %p31
      %p33 = scmp.ne.s32.totalorder %s22, %s25
      %p34 = scmp.eq.s32.totalorder %s17, 1
      %p35 = por %p33, %p34
      %p36 = scmp.ne.s32.totalorder %s25, %s26
      %p37 = scmp.eq.s32.totalorder %s17, 0
      %p38 = por %p36, %p37
      %p39 = scmp.ne.s32.totalorder %s25, %s26
      %p40 = scmp.eq.s32.totalorder %s18, 1
      %p41 = por %p39, %p40
      %p43 = scmp.ne.s32.totalorder %s26, %s42
      %p44 = scmp.eq.s32.totalorder %s18, 0
      %p45 = por %p43, %p44
      %s47 = sadd.s32 %s46, 1
      %p50 = scmp.eq.s32.totalorder %s12, 1
      %p51 = scmp.ne.s32.totalorder %s46, %s48
      %p52 = scmp.eq.s32.totalorder %s12, 0
      %p53 = por %p51, %p52
      %p54 = scmp.ne.s32.totalorder %s46, %s48
      %p55 = scmp.eq.s32.totalorder %s17, 1
      %p56 = por %p54, %p55
      %p57 = scmp.ne.s32.totalorder %s48, %s49
      %p58 = scmp.eq.s32.totalorder %s17, 0
      %p59 = por %p57, %p58
      %p60 = scmp.ne.s32.totalorder %s48, %s49
      %p61 = scmp.eq.s32.totalorder %s18, 1
      %p62 = por %p60, %p61
      %p64 = scmp.ne.s32.totalorder %s49, %s63
      %p65 = scmp.eq.s32.totalorder %s18, 0
      %p66 = por %p64, %p65
      %s68 = sadd.s32 %s67, 1
      %p71 = scmp.eq.s32.totalorder %s12, 1
      %p72 = scmp.ne.s32.totalorder %s67, %s69
      %p73 = scmp.eq.s32.totalorder %s12, 0
      %p74 = por %p72, %p73
      %p75 = scmp.ne.s32.totalorder %s67, %s69
      %p76 = scmp.eq.s32.totalorder %s17, 1
      %p77 = por %p75, %p76
      %p78 = scmp.ne.s32.totalorder %s69, %s70
      %p79 = scmp.eq.s32.totalorder %s17, 0
      %p80 = por %p78, %p79
      %p81 = scmp.ne.s32.totalorder %s69, %s70
      %p82 = scmp.eq.s32.totalorder %s18, 1
      %p83 = por %p81, %p82
      %p85 = scmp.ne.s32.totalorder %s70, %s84
      %p86 = scmp.eq.s32.totalorder %s18, 0
      %p87 = por %p85, %p86
      %s88 = ssub.s32 %s12, %s19
      %p89 = scmp.eq.s32.totalorder %s88, 0
      %s91 = sadd.s32 %s90, 1
      %s92 = scalar_select %p89, %s90, %s91
      %p95 = pneg %p89
      %p96 = scmp.eq.s32.totalorder %s12, 1
      %p97 = por %p95, %p96
      %p98 = scmp.ne.s32.totalorder %s90, %s93
      %p99 = scmp.eq.s32.totalorder %s12, 0
      %p100 = por %p98, %p99
      %p101 = scmp.ne.s32.totalorder %s90, %s93
      %p102 = scmp.eq.s32.totalorder %s17, 1
      %p103 = por %p101, %p102
      %p104 = scmp.ne.s32.totalorder %s93, %s94
      %p105 = scmp.eq.s32.totalorder %s17, 0
      %p106 = por %p104, %p105
      %p107 = scmp.ne.s32.totalorder %s93, %s94
      %p108 = scmp.eq.s32.totalorder %s18, 1
      %p109 = por %p107, %p108
      %p111 = scmp.ne.s32.totalorder %s94, %s110
      %p112 = scmp.eq.s32.totalorder %s18, 0
      %p113 = por %p111, %p112
      %p114 = scmp.le.s32.totalorder 1, %s12
      %p115 = scmp.lt.s32.totalorder %s12, 3
      %p116 = pnand %p114, %p115
      %p117 = pneg %p116
      // Predicated region
      $region9: #{tpu_custom_call.1} parent=5 // pred_check
        _
      $region10: #{tpu_custom_call.1} parent=5 // pred_check_branch
        %119 = sbr.rel (%p116) target = $region12
      $region11: #{tpu_custom_call.1} parent=5 // pred_region
        %s120 = ssub.s32 %s12, 1
        // Predicated region
        $region13: #{tpu_custom_call.1} parent=11 // pred_check
          %p121 = pneg %p59
        $region14: #{tpu_custom_call.1} parent=11 // pred_check_branch
          %123 = sbr.rel (%p121) target = $region16
        $region15: #{tpu_custom_call.1} parent=11 // pred_region
          _
        $region16: #{tpu_custom_call.1} parent=11 // pred_fallthru
          _
        // Predicated region
        $region17: #{tpu_custom_call.1} parent=11 // pred_check
          %p124 = pneg %p80
        $region18: #{tpu_custom_call.1} parent=11 // pred_check_branch
          %126 = sbr.rel (%p124) target = $region20
        $region19: #{tpu_custom_call.1} parent=11 // pred_region
          _
        $region20: #{tpu_custom_call.1} parent=11 // pred_fallthru
          _
      $region12: #{tpu_custom_call.1} parent=5 // pred_fallthru
        _
      %p127 = scmp.lt.s32.totalorder %s12, 2
      // Predicated region
      $region21: #{tpu_custom_call.1} parent=5 // pred_check
        %p128 = pneg %p127
      $region22: #{tpu_custom_call.1} parent=5 // pred_check_branch
        %130 = sbr.rel (%p128) target = $region24
      $region23: #{tpu_custom_call.1} parent=5 // pred_region
        // Predicated region
        $region25: #{tpu_custom_call.1} parent=23 // pred_check
          %p131 = pneg %p32
        $region26: #{tpu_custom_call.1} parent=23 // pred_check_branch
          %133 = sbr.rel (%p131) target = $region28
        $region27: #{tpu_custom_call.1} parent=23 // pred_region
          %s134 = smul.u32 8, %s12
          %p135 = scmp.lt.s32.totalorder %s134, 15
          %s136 = scalar_select %p135, %s134, 15
          %s137 = smul.addr %s136, 4
          %s138 = scalar_lea.vmem %s0, %s137
          %s139 = smul.u32 8, %s12
        $region28: #{tpu_custom_call.1} parent=23 // pred_fallthru
          _
      $region24: #{tpu_custom_call.1} parent=5 // pred_fallthru
        _
      %p140 = scmp.le.s32.totalorder 1, %s12
      %p141 = scmp.lt.s32.totalorder %s12, 3
      %p142 = pnand %p140, %p141
      %p143 = pneg %p142
      // Predicated region
      $region29: #{tpu_custom_call.1} parent=5 // pred_check
        _
      $region30: #{tpu_custom_call.1} parent=5 // pred_check_branch
        %145 = sbr.rel (%p142) target = $region32
      $region31: #{tpu_custom_call.1} parent=5 // pred_region
        %s146 = ssub.s32 %s12, 1
        %s147 = smul.u32 8, %s17
        %p148 = scmp.lt.s32.totalorder %s147, 15
        %s149 = scalar_select %p148, %s147, 15
        %s150 = smul.addr %s149, 4
        %s151 = scalar_lea.vmem %s0, %s150
        %p152 = pneg %p38
        %p153 = pneg %p35
        %p154 = pneg %p59
        %p155 = pneg %p56
        %p156 = pneg %p80
        %p157 = pneg %p77
        %p158 = pneg %p106
        %p159 = pneg %p103
        %s160 = sand.u32 %s93, 1
        %s161 = scalar_lea.sflag [#allocation3], %s160
        %s162 = sand.u32 %s93, 1
        %s163 = smul.addr %s162, 64
        %s164 = scalar_lea.vmem [#allocation2], %s163
        %s165 = smul.u32 8, %s17
        %p166 = scmp.lt.s32.totalorder %s165, 15
        %s167 = scalar_select %p166, %s165, 15
        %s168 = smul.addr %s167, 4
        %s169 = scalar_lea.vmem %s0, %s168
        %s170 = smul.u32 8, %s17
        %s171 = smul.u32 8, %s17
        %v173 = vld [vmem:[%s169] sm:$0xf]
        %v174 = vld [vmem:[%s169 + $0x4] sm:$0xf]
        %v175 = vld [vmem:[%s169 + $0x8] sm:$0xf]
        %v176 = vld [vmem:[%s169 + $0xc] sm:$0xf]
        %v177 = vld [vmem:[%s169 + $0x10] sm:$0xf]
        %v178 = vld [vmem:[%s169 + $0x14] sm:$0xf]
        %v179 = vld [vmem:[%s169 + $0x18] sm:$0xf]
        %v180 = vld [vmem:[%s169 + $0x1c] sm:$0xf]
        %v181 = vld [vmem:[%s1] sm:$0xff]
        %v182 = vld [vmem:[%s1 + $0x8] sm:$0xff]
        %v183 = vld [vmem:[%s1 + $0x10] sm:$0xff]
        %v184 = vld [vmem:[%s1 + $0x18] sm:$0xff]
        %v185 = vld [vmem:[%s1 + $0x20] sm:$0xff]
        %v186 = vld [vmem:[%s1 + $0x28] sm:$0xff]
        %v187 = vld [vmem:[%s1 + $0x30] sm:$0xff]
        %v188 = vld [vmem:[%s1 + $0x38] sm:$0xff]
        %v189 = vld [vmem:[%s1 + $0x40] sm:$0xff]
        %v190 = vld [vmem:[%s1 + $0x48] sm:$0xff]
        %v191 = vld [vmem:[%s1 + $0x50] sm:$0xff]
        %v192 = vld [vmem:[%s1 + $0x58] sm:$0xff]
        %v193 = vld [vmem:[%s1 + $0x60] sm:$0xff]
        %v194 = vld [vmem:[%s1 + $0x68] sm:$0x33]
        %v195 = vld [vmem:[%s2] sm:$0x3]
        %v197 = vlaneseq
        %v198 = vshrl.u32 %v197, 7
        %v199 = vsub.s32 0, %v198
        %v200 = vrot.slane %v195, %v199
        %v201 = vlaneseq
        %v202 = vshrl.u32 %v201, 7
        %v203 = vsub.s32 1, %v202
        %v204 = vrot.slane %v195, %v203
        %v215 = vunpack.c.l.b16 %v173
        %v216 = vunpack.c.l.b16 %v174
        %v217 = vunpack.c.l.b16 %v175
        %v218 = vunpack.c.l.b16 %v176
        %v219 = vunpack.c.l.b16 %v177
        %v220 = vunpack.c.l.b16 %v178
        %v221 = vunpack.c.l.b16 %v179
        %v222 = vunpack.c.l.b16 %v180
        %v223 = vpack.c.b16 %v216, %v215
        %v224 = vpack.c.b16 %v218, %v217
        %v225 = vpack.c.b16 %v220, %v219
        %v226 = vpack.c.b16 %v222, %v221
        %v241 = vunpack.c.l.b16 %v181
        %v242 = vunpack.c.h.b16 %v181
        %v243 = vunpack.c.l.b16 %v182
        %v244 = vunpack.c.h.b16 %v182
        %v245 = vunpack.c.l.b16 %v183
        %v246 = vunpack.c.h.b16 %v183
        %v247 = vunpack.c.l.b16 %v184
        %v248 = vunpack.c.h.b16 %v184
        %v249 = vunpack.c.l.b16 %v185
        %v250 = vunpack.c.h.b16 %v185
        %v251 = vunpack.c.l.b16 %v186
        %v252 = vunpack.c.h.b16 %v186
        %v253 = vunpack.c.l.b16 %v187
        %v254 = vunpack.c.h.b16 %v187
        %v255 = vunpack.c.l.b16 %v188
        %v256 = vunpack.c.h.b16 %v188
        %v257 = vunpack.c.l.b16 %v189
        %v258 = vunpack.c.h.b16 %v189
        %v259 = vunpack.c.l.b16 %v190
        %v260 = vunpack.c.h.b16 %v190
        %v261 = vunpack.c.l.b16 %v191
        %v262 = vunpack.c.h.b16 %v191
        %v263 = vunpack.c.l.b16 %v192
        %v264 = vunpack.c.h.b16 %v192
        %v265 = vunpack.c.l.b16 %v193
        %v266 = vunpack.c.h.b16 %v193
        %v267 = vunpack.c.l.b16 %v194
        %v268 = vunpack.c.h.b16 %v194
        %v269 = vpack.c.b16 %v243, %v241
        %v270 = vpack.c.b16 %v244, %v242
        %v271 = vpack.c.b16 %v247, %v245
        %v272 = vpack.c.b16 %v248, %v246
        %v273 = vpack.c.b16 %v251, %v249
        %v274 = vpack.c.b16 %v252, %v250
        %v275 = vpack.c.b16 %v255, %v253
        %v276 = vpack.c.b16 %v256, %v254
        %v277 = vpack.c.b16 %v259, %v257
        %v278 = vpack.c.b16 %v260, %v258
        %v279 = vpack.c.b16 %v263, %v261
        %v280 = vpack.c.b16 %v264, %v262
        %v281 = vpack.c.b16 %v267, %v265
        %v282 = vpack.c.b16 %v268, %v266
        %vm295 = vcmask 883712
        %v297 = vsel %vm295, %v223, 0
        %v300 = vsel %vm295, %v224, 0
        %v303 = vsel %vm295, %v225, 0
        %v306 = vsel %vm295, %v226, 0
        %vm308 = vcmask 1045504
        %v310 = vsel %vm308, %v281, 0
        %v313 = vsel %vm308, %v282, 0
        %315 = vmatprep.subr.bf16.mxu0 %v270
        %316 = vmatpush1.bf16.msra.mxu0 %v269
        %317 = vmatprep.subr.bf16.mxu0 %v272
        %318 = vmatpush1.bf16.msra.mxu0 %v271
        %319 = vmatprep.subr.bf16.mxu0 %v274
        %320 = vmatpush1.bf16.msra.mxu0 %v273
        %321 = vmatprep.subr.bf16.mxu0 %v276
        %322 = vmatpush1.bf16.msra.mxu0 %v275
        %323 = vmatprep.subr.bf16.mxu0 %v278
        %324 = vmatpush1.bf16.msra.mxu0 %v277
        %325 = vmatprep.subr.bf16.mxu0 %v280
        %326 = vmatpush1.bf16.msra.mxu0 %v279
        %327 = vmatprep.subr.bf16.mxu0 %v313
        %328 = vmatpush1.bf16.msra.mxu0 %v310
        %329 = vmatprep.subr.bf16.mxu0 0
        %330 = vmatpush1.bf16.msra.mxu0 0
        %331 = vmatprep.subr.bf16.mxu0 0
        %332 = vmatpush1.bf16.msra.mxu0 0
        %333 = vmatprep.subr.bf16.mxu0 0
        %334 = vmatpush1.bf16.msra.mxu0 0
        %335 = vmatprep.subr.bf16.mxu0 0
        %336 = vmatpush1.bf16.msra.mxu0 0
        %337 = vmatprep.subr.bf16.mxu0 0
        %338 = vmatpush1.bf16.msra.mxu0 0
        %339 = vmatprep.subr.bf16.mxu0 0
        %340 = vmatpush1.bf16.msra.mxu0 0
        %341 = vmatprep.subr.bf16.mxu0 0
        %342 = vmatpush1.bf16.msra.mxu0 0
        %343 = vmatprep.subr.bf16.mxu0 0
        %344 = vmatpush1.bf16.msra.mxu0 0
        %345 = vmatprep.subr.bf16.mxu0 0
        %346 = vmatpush1.bf16.msra.mxu0 0
        %347 = vmatprep.mubr.bf16.mxu0 0
        %348 = vmatmul.mubr.bf16.gmra.mrb[0].mxu0 %v297
        %v349 = vpop.f32.mrb[0].mxu0
        %v350 = vadd.f32 %v200, %v349
        %v351 = vpop.f32.mrb[0].mxu0
        %v352 = vadd.f32 %v204, %v351
        %v353 = vpop.f32.mrb[0].mxu0
        %v354 = vadd.f32 %v200, %v353
        %v355 = vpop.f32.mrb[0].mxu0
        %v356 = vadd.f32 %v204, %v355
        %357 = vmatprep.mubr.bf16.mxu0 0
        %358 = vmatmul.mubr.bf16.gmra.mrb[0].mxu0 %v300
        %v359 = vpop.f32.mrb[0].mxu0
        %v360 = vadd.f32 %v200, %v359
        %v361 = vpop.f32.mrb[0].mxu0
        %v362 = vadd.f32 %v204, %v361
        %v363 = vpop.f32.mrb[0].mxu0
        %v364 = vadd.f32 %v200, %v363
        %v365 = vpop.f32.mrb[0].mxu0
        %v366 = vadd.f32 %v204, %v365
        %367 = vmatprep.mubr.bf16.mxu0 0
        %368 = vmatmul.mubr.bf16.gmra.mrb[0].mxu0 %v303
        %v369 = vpop.f32.mrb[0].mxu0
        %v370 = vadd.f32 %v200, %v369
        %v371 = vpop.f32.mrb[0].mxu0
        %v372 = vadd.f32 %v204, %v371
        %v373 = vpop.f32.mrb[0].mxu0
        %v374 = vadd.f32 %v200, %v373
        %v375 = vpop.f32.mrb[0].mxu0
        %v376 = vadd.f32 %v204, %v375
        %377 = vmatprep.mubr.bf16.mxu0 0
        %378 = vmatmul.mubr.bf16.gmra.mrb[0].mxu0 %v306
        %v379 = vpop.f32.mrb[0].mxu0
        %v380 = vadd.f32 %v200, %v379
        %v381 = vpop.f32.mrb[0].mxu0
        %v382 = vadd.f32 %v204, %v381
        %v383 = vpop.f32.mrb[0].mxu0
        %v384 = vadd.f32 %v200, %v383
        %v385 = vpop.f32.mrb[0].mxu0
        %v386 = vadd.f32 %v204, %v385
        %387 = vdwg.mxu0
        %v388 = vxor.u32 %v350, 2147483648
        %v389 = vxor.u32 %v352, 2147483648
        %v390 = vxor.u32 %v354, 2147483648
        %v391 = vxor.u32 %v356, 2147483648
        %v392 = vxor.u32 %v360, 2147483648
        %v393 = vxor.u32 %v362, 2147483648
        %v394 = vxor.u32 %v364, 2147483648
        %v395 = vxor.u32 %v366, 2147483648
        %v396 = vxor.u32 %v370, 2147483648
        %v397 = vxor.u32 %v372, 2147483648
        %v398 = vxor.u32 %v374, 2147483648
        %v399 = vxor.u32 %v376, 2147483648
        %v400 = vxor.u32 %v380, 2147483648
        %v401 = vxor.u32 %v382, 2147483648
        %v402 = vxor.u32 %v384, 2147483648
        %v403 = vxor.u32 %v386, 2147483648
        %v404 = vmul.f32 %v388, 1.442695
        %v405 = vpow.pop %v404
        %v406 = vmul.f32 %v389, 1.442695
        %v407 = vpow.pop %v406
        %v408 = vmul.f32 %v390, 1.442695
        %v409 = vpow.pop %v408
        %v410 = vmul.f32 %v391, 1.442695
        %v411 = vpow.pop %v410
        %v412 = vmul.f32 %v392, 1.442695
        %v413 = vpow.pop %v412
        %v414 = vmul.f32 %v393, 1.442695
        %v415 = vpow.pop %v414
        %v416 = vmul.f32 %v394, 1.442695
        %v417 = vpow.pop %v416
        %v418 = vmul.f32 %v395, 1.442695
        %v419 = vpow.pop %v418
        %v420 = vmul.f32 %v396, 1.442695
        %v421 = vpow.pop %v420
        %v422 = vmul.f32 %v397, 1.442695
        %v423 = vpow.pop %v422
        %v424 = vmul.f32 %v398, 1.442695
        %v425 = vpow.pop %v424
        %v426 = vmul.f32 %v399, 1.442695
        %v427 = vpow.pop %v426
        %v428 = vmul.f32 %v400, 1.442695
        %v429 = vpow.pop %v428
        %v430 = vmul.f32 %v401, 1.442695
        %v431 = vpow.pop %v430
        %v432 = vmul.f32 %v402, 1.442695
        %v433 = vpow.pop %v432
        %v434 = vmul.f32 %v403, 1.442695
        %v435 = vpow.pop %v434
        %v436 = vadd.f32 %v405, 1.0
        %v437 = vadd.f32 %v407, 1.0
        %v438 = vadd.f32 %v409, 1.0
        %v439 = vadd.f32 %v411, 1.0
        %v440 = vadd.f32 %v413, 1.0
        %v441 = vadd.f32 %v415, 1.0
        %v442 = vadd.f32 %v417, 1.0
        %v443 = vadd.f32 %v419, 1.0
        %v444 = vadd.f32 %v421, 1.0
        %v445 = vadd.f32 %v423, 1.0
        %v446 = vadd.f32 %v425, 1.0
        %v447 = vadd.f32 %v427, 1.0
        %v448 = vadd.f32 %v429, 1.0
        %v449 = vadd.f32 %v431, 1.0
        %v450 = vadd.f32 %v433, 1.0
        %v451 = vadd.f32 %v435, 1.0
        %v452 = vrcp.pop %v436
        %v453 = vmul.f32 1.0, %v452
        %v454 = vrcp.pop %v437
        %v455 = vmul.f32 1.0, %v454
        %v456 = vrcp.pop %v438
        %v457 = vmul.f32 1.0, %v456
        %v458 = vrcp.pop %v439
        %v459 = vmul.f32 1.0, %v458
        %v460 = vrcp.pop %v440
        %v461 = vmul.f32 1.0, %v460
        %v462 = vrcp.pop %v441
        %v463 = vmul.f32 1.0, %v462
        %v464 = vrcp.pop %v442
        %v465 = vmul.f32 1.0, %v464
        %v466 = vrcp.pop %v443
        %v467 = vmul.f32 1.0, %v466
        %v468 = vrcp.pop %v444
        %v469 = vmul.f32 1.0, %v468
        %v470 = vrcp.pop %v445
        %v471 = vmul.f32 1.0, %v470
        %v472 = vrcp.pop %v446
        %v473 = vmul.f32 1.0, %v472
        %v474 = vrcp.pop %v447
        %v475 = vmul.f32 1.0, %v474
        %v476 = vrcp.pop %v448
        %v477 = vmul.f32 1.0, %v476
        %v478 = vrcp.pop %v449
        %v479 = vmul.f32 1.0, %v478
        %v480 = vrcp.pop %v450
        %v481 = vmul.f32 1.0, %v480
        %v482 = vrcp.pop %v451
        %v483 = vmul.f32 1.0, %v482
        %v484 = vmul.f32 %v350, %v453
        %v485 = vmul.f32 %v352, %v455
        %v486 = vmul.f32 %v354, %v457
        %v487 = vmul.f32 %v356, %v459
        %v488 = vmul.f32 %v360, %v461
        %v489 = vmul.f32 %v362, %v463
        %v490 = vmul.f32 %v364, %v465
        %v491 = vmul.f32 %v366, %v467
        %v492 = vmul.f32 %v370, %v469
        %v493 = vmul.f32 %v372, %v471
        %v494 = vmul.f32 %v374, %v473
        %v495 = vmul.f32 %v376, %v475
        %v496 = vmul.f32 %v380, %v477
        %v497 = vmul.f32 %v382, %v479
        %v498 = vmul.f32 %v384, %v481
        %v499 = vmul.f32 %v386, %v483
        %v500 = vpack.c.bf16 %v486, %v484
        %v501 = vpack.c.bf16 %v487, %v485
        %v502 = vpack.c.bf16 %v490, %v488
        %v503 = vpack.c.bf16 %v491, %v489
        %v504 = vpack.c.bf16 %v494, %v492
        %v505 = vpack.c.bf16 %v495, %v493
        %v506 = vpack.c.bf16 %v498, %v496
        %v507 = vpack.c.bf16 %v499, %v497
        %v516 = vunpack.c.l.b16 %v500
        %v517 = vunpack.c.l.b16 %v501
        %v518 = vunpack.c.h.b16 %v500
        %v519 = vunpack.c.h.b16 %v501
        %v520 = vunpack.c.l.b16 %v502
        %v521 = vunpack.c.l.b16 %v503
        %v522 = vunpack.c.h.b16 %v502
        %v523 = vunpack.c.h.b16 %v503
        %v524 = vunpack.c.l.b16 %v504
        %v525 = vunpack.c.l.b16 %v505
        %v526 = vunpack.c.h.b16 %v504
        %v527 = vunpack.c.h.b16 %v505
        %v528 = vunpack.c.l.b16 %v506
        %v529 = vunpack.c.l.b16 %v507
        %v530 = vunpack.c.h.b16 %v506
        %v531 = vunpack.c.h.b16 %v507
        %v532 = vpack.c.b16 %v517, %v516
        %v533 = vpack.c.b16 %v519, %v518
        %v534 = vpack.c.b16 %v521, %v520
        %v535 = vpack.c.b16 %v523, %v522
        %v536 = vpack.c.b16 %v525, %v524
        %v537 = vpack.c.b16 %v527, %v526
        %v538 = vpack.c.b16 %v529, %v528
        %v539 = vpack.c.b16 %v531, %v530
        %548 = vst [vmem:[%s164] sm:$0xff] %v532
        %549 = vst [vmem:[%s164 + $0x8] sm:$0xff] %v533
        %550 = vst [vmem:[%s164 + $0x10] sm:$0xff] %v534
        %551 = vst [vmem:[%s164 + $0x18] sm:$0xff] %v535
        %552 = vst [vmem:[%s164 + $0x20] sm:$0xff] %v536
        %553 = vst [vmem:[%s164 + $0x28] sm:$0xff] %v537
        %554 = vst [vmem:[%s164 + $0x30] sm:$0xff] %v538
        %555 = vst [vmem:[%s164 + $0x38] sm:$0xff] %v539
        %s556 = sand.u32 %s93, 1
        %s557 = scalar_lea.sflag [#allocation3], %s556
        %s558 = sand.u32 %s93, 1
        %s559 = smul.addr %s558, 64
        %s560 = scalar_lea.vmem [#allocation2], %s559
        // Predicated region
        $region33: #{tpu_custom_call.1} parent=31 // pred_check
          %p561 = pneg %p103
        $region34: #{tpu_custom_call.1} parent=31 // pred_check_branch
          %563 = sbr.rel (%p561) target = $region36
        $region35: #{tpu_custom_call.1} parent=31 // pred_region
          %s564 = smul.u32 8, %s17
          %s566 = ssub.s32 1024, 1024
          %567 = vsyncadd %s557, %s566
          %s568 = smul.addr %s564, 2
          %s569 = smul.addr %s568, 64
          %s570 = scalar_lea.hbm %s3, %s569
          %s571 = sshll.u32 %s560, 4
          %s572 = int_to_ptr.vmem [resolvable:$true] %s571
          %577 = dma.vmem_to_hbm [thread:$0]  %s572, 1024, %s570, %s557, 128, 128, 8
        $region36: #{tpu_custom_call.1} parent=31 // pred_fallthru
          _
      $region32: #{tpu_custom_call.1} parent=5 // pred_fallthru
        _
      %p578 = scmp.le.s32.totalorder 2, %s12
      // Predicated region
      $region37: #{tpu_custom_call.1} parent=5 // pred_check
        %p579 = pneg %p578
      $region38: #{tpu_custom_call.1} parent=5 // pred_check_branch
        %581 = sbr.rel (%p579) target = $region40
      $region39: #{tpu_custom_call.1} parent=5 // pred_region
        %s582 = ssub.s32 %s12, 2
        // Predicated region
        $region41: #{tpu_custom_call.1} parent=39 // pred_check
          %p583 = pneg %p109
        $region42: #{tpu_custom_call.1} parent=39 // pred_check_branch
          %585 = sbr.rel (%p583) target = $region44
        $region43: #{tpu_custom_call.1} parent=39 // pred_region
          %s586 = sand.u32 %s94, 1
          %s587 = scalar_lea.sflag [#allocation3], %s586
          %s588 = sand.u32 %s94, 1
          %s589 = smul.addr %s588, 64
          %s590 = scalar_lea.vmem [#allocation2], %s589
          %591 = dma.done %s587, 1024
        $region44: #{tpu_custom_call.1} parent=39 // pred_fallthru
          _
      $region40: #{tpu_custom_call.1} parent=5 // pred_fallthru
        _
    $region6: #{tpu_custom_call.1} parent=1 // loop_footer
      %s16 = sadd.s32 1, %s12
    $region7: #{tpu_custom_call.1} parent=1 // loop_footer_branch
      %11 = sbr.rel target = $region3
    $region8: #{tpu_custom_call.1} parent=1 // loop_exit
      _
    %592 = vsyncpa [#allocation3], 1
    %s593 = scalar_lea.sflag [#allocation3], 1
    %594 = vsyncpa %s593, 1

</llo_original>
